<compile_context>
chip_gen: v7x
topology: tpu7x:2x2x1
jax: 0.10.0
libtpu: 0.0.40
codegen_flags: <defaults>
</compile_context>

<pallas_src>
import jax
import jax.numpy as jnp
from jax.experimental import pallas as pl
from jax.experimental.pallas import tpu as pltpu


def _make_perm_loss_kernel(binary_targets: bool):
    def kernel(nsum_ref, pred_ref, gt_ref, src_ref, tgt_ref, row_ref, col_ref,
               out_ref, acc_ref):
        i = pl.program_id(0)

        @pl.when(i == 0)
        def _():
            acc_ref[...] = jnp.zeros_like(acc_ref)

        p = pred_ref[...].astype(jnp.float32)          # (TB, FLAT)
        t = gt_ref[...].astype(jnp.float32)            # (TB, FLAT)

        # Ragged validity mask rebuilt from tiny blocks:
        #   row_ref/col_ref: (1, FLAT) flat-index -> (row, col) lookup tables
        #   src_ref/tgt_ref: (TB, 1) per-batch valid node counts (0 on padded
        #   batch rows, so the ragged last tile is fully masked out).
        valid = (row_ref[...] < src_ref[...]) & (col_ref[...] < tgt_ref[...])

        if binary_targets:
            # gt is a strict 0/1 permutation matrix -> one log per element.
            q = jnp.where(t > 0.5, p, 1.0 - p)
            ll = jnp.maximum(jnp.log(q), jnp.float32(-100.0))
        else:
            # torch.nn.functional.binary_cross_entropy parity (log clamp -100).
            ll = (t * jnp.maximum(jnp.log(p), jnp.float32(-100.0))
                  + (1.0 - t) * jnp.maximum(jnp.log(1.0 - p), jnp.float32(-100.0)))

        # jnp.where (not multiply) so NaN/Inf in masked-out / out-of-bounds
        # entries never poison the accumulator.
        acc_ref[...] += jnp.where(valid, ll, jnp.float32(0.0))

        @pl.when(i == pl.num_programs(0) - 1)
        def _():
            # Single cross-lane reduction + sign flip + division, once per call.
            n_sum = nsum_ref[0].astype(jnp.float32)
            out_ref[...] = jnp.reshape(-jnp.sum(acc_ref[...]) / n_sum, (1, 1))

    return kernel


def permutation_loss(pred_dsmat, gt_perm, src_ns, tgt_ns, *,
                     batch_tile=None, assume_binary_gt=True):
    """Pallas TPU implementation of PermutationLoss.forward."""
    # TODO(synk): torch's host-side value-range asserts (0 <= S,X <= 1) and the
    # sum(src_ns)==0 divide-by-zero case have no traced / in-kernel equivalent.
    pred = jnp.asarray(pred_dsmat)
    gt = jnp.asarray(gt_perm)
    if not jnp.issubdtype(pred.dtype, jnp.floating):
        pred = pred.astype(jnp.float32)
    if assume_binary_gt:
        # Exactly 0/1 -> lossless in bf16; cuts gt HBM bytes in half.
        gt = gt.astype(jnp.bfloat16)
    elif not jnp.issubdtype(gt.dtype, jnp.floating):
        gt = gt.astype(jnp.float32)
    src_ns = jnp.asarray(src_ns, jnp.int32)
    tgt_ns = jnp.asarray(tgt_ns, jnp.int32)

    B, N1, N2 = pred.shape
    FLAT = N1 * N2

    # Lane-dense layout: flatten the (N1, N2) node grid onto the lane axis.
    # (Free metadata reshape for contiguous arrays; no HBM copy.)
    # TODO(synk): for very large N1*N2 (>~100k) the flattened axis should also
    # be tiled with a second grid dimension; typical graph-matching sizes fit.
    pred2 = pred.reshape(B, FLAT)
    gt2 = gt.reshape(B, FLAT)

    pred_b = pred2.dtype.itemsize
    gt_b = gt2.dtype.itemsize
    per_row = FLAT * (pred_b + gt_b)

    # Batch tile: ~2 MiB of streamed input per grid step and >= ~4 steps when
    # the batch allows, so the pipeline overlaps DMA with compute.
    if batch_tile is None:
        tb = max(1, (2 * 1024 * 1024) // per_row)
        tb = min(tb, max(1, -(-B // 4)))          # prefer >= 4 grid steps
    else:
        tb = int(batch_tile)
    # Sublane alignment for the 2-D (TB, FLAT) block (16 when any streamed
    # input is 16-bit); a full-batch block (TB == B) is always layout-legal.
    min_sub = 16 if min(pred_b, gt_b) < 4 else 8
    if tb < B:
        tb = max(min_sub, (tb // min_sub) * min_sub)
    if tb >= B:
        tb = B
    TB = int(tb)

    num_tiles = (B + TB - 1) // TB
    b_pad = num_tiles * TB

    # Only the tiny per-batch node-count vectors are padded (with 0 => padded
    # rows fully masked in-kernel). pred/gt are NOT copied; the ragged last
    # block simply over-runs and its garbage is masked out by jnp.where.
    src2 = src_ns.reshape(B, 1)
    tgt2 = tgt_ns.reshape(B, 1)
    if b_pad != B:
        pad = b_pad - B
        src2 = jnp.concatenate([src2, jnp.zeros((pad, 1), jnp.int32)], axis=0)
        tgt2 = jnp.concatenate([tgt2, jnp.zeros((pad, 1), jnp.int32)], axis=0)

    # Flat-index -> (row, col) lookup tables (tiny, constant across steps).
    kidx = jnp.arange(FLAT, dtype=jnp.int32)
    row_of = (kidx // N2).reshape(1, FLAT)
    col_of = (kidx % N2).reshape(1, FLAT)

    # n_sum = sum_b src_ns[b]; prefetched into SMEM, divided in-kernel.
    n_sum = jnp.sum(src_ns).astype(jnp.int32).reshape((1,))

    # Explicit scoped-VMEM budget: double-buffered input blocks + f32
    # accumulator + a handful of f32 intermediates; capped for v7x's 64 MiB.
    block_elems = TB * FLAT
    vmem_est = (2 * block_elems * (pred_b + gt_b)   # double-buffered pred/gt
                + block_elems * 4                   # accumulator
                + 5 * block_elems * 4               # f32 temporaries
                + 8 * FLAT * 4 + 8 * TB * 4)        # index / count blocks
    vmem_limit = int(min(48 * 1024 * 1024, max(16 * 1024 * 1024, 2 * vmem_est)))

    out = pl.pallas_call(
        _make_perm_loss_kernel(bool(assume_binary_gt)),
        out_shape=jax.ShapeDtypeStruct((1, 1), jnp.float32),
        grid_spec=pltpu.PrefetchScalarGridSpec(
            num_scalar_prefetch=1,                       # n_sum -> SMEM
            grid=(num_tiles,),
            in_specs=[
                pl.BlockSpec((TB, FLAT), lambda i, n: (i, 0)),   # pred
                pl.BlockSpec((TB, FLAT), lambda i, n: (i, 0)),   # gt
                pl.BlockSpec((TB, 1), lambda i, n: (i, 0)),      # src_ns
                pl.BlockSpec((TB, 1), lambda i, n: (i, 0)),      # tgt_ns
                pl.BlockSpec((1, FLAT), lambda i, n: (0, 0)),    # row of flat idx
                pl.BlockSpec((1, FLAT), lambda i, n: (0, 0)),    # col of flat idx
            ],
            out_specs=pl.BlockSpec((1, 1), lambda i, n: (0, 0)),
            scratch_shapes=[pltpu.VMEM((TB, FLAT), jnp.float32)],
        ),
        compiler_params=pltpu.CompilerParams(
            dimension_semantics=("arbitrary",),          # accumulates across tiles
            vmem_limit_bytes=vmem_limit),
    )(n_sum, pred2, gt2, src2, tgt2, row_of, col_of)
    return out[0, 0]


def _permutation_loss_ref(pred, gt, src_ns, tgt_ns):
    """Pure-JAX reference mirroring the PyTorch per-batch-slice loop."""
    pred = jnp.asarray(pred, jnp.float32)
    gt = jnp.asarray(gt, jnp.float32)
    loss = jnp.float32(0.0)
    n_sum = 0.0
    for b in range(pred.shape[0]):
        s = int(src_ns[b])
        t = int(tgt_ns[b])
        p = pred[b, :s, :t]
        g = gt[b, :s, :t]
        log_p = jnp.maximum(jnp.log(p), -100.0)
        log_1mp = jnp.maximum(jnp.log(1.0 - p), -100.0)
        loss = loss + jnp.sum(-(g * log_p + (1.0 - g) * log_1mp))
        n_sum += float(s)
    return loss / jnp.float32(n_sum)


if __name__ == "__main__":
    key = jax.random.PRNGKey(0)
    k_pred, k_perm, k_pred2, k_perm2, k_ns = jax.random.split(key, 5)

    # ---- Case 1: tiny batch (single grid step, full-dim block) ----
    B, N1, N2 = 2, 16, 16
    pred = jax.random.uniform(k_pred, (B, N1, N2), jnp.float32,
                              minval=0.01, maxval=0.99)
    perms = jnp.stack([jax.random.permutation(k, N2)
                       for k in jax.random.split(k_perm, B)])
    gt = jax.nn.one_hot(perms, N2, dtype=jnp.float32)            # (B, N1, N2)
    src_ns = jnp.array([16, 11], dtype=jnp.int32)
    tgt_ns = jnp.array([16, 13], dtype=jnp.int32)

    ref = _permutation_loss_ref(pred, gt, src_ns, tgt_ns)
    loss = permutation_loss(pred, gt, src_ns, tgt_ns)
    jax.block_until_ready(loss)
    assert jnp.allclose(loss, ref, rtol=1e-5, atol=1e-5), (loss, ref)

    # ---- Case 2: multi-step grid with a ragged last batch tile ----
    B2 = 20
    pred2 = jax.random.uniform(k_pred2, (B2, N1, N2), jnp.float32,
                               minval=0.01, maxval=0.99)
    perms2 = jnp.stack([jax.random.permutation(k, N2)
                        for k in jax.random.split(k_perm2, B2)])
    gt2 = jax.nn.one_hot(perms2, N2, dtype=jnp.float32)
    ns = jax.random.randint(k_ns, (2, B2), 5, N1 + 1)
    src_ns2, tgt_ns2 = ns[0].astype(jnp.int32), ns[1].astype(jnp.int32)

    ref2 = _permutation_loss_ref(pred2, gt2, src_ns2, tgt_ns2)

    # bf16-gt + one-log binary fast path; 2 grid steps, last tile 4 real rows.
    loss2 = permutation_loss(pred2, gt2, src_ns2, tgt_ns2, batch_tile=16)
    jax.block_until_ready(loss2)
    assert jnp.allclose(loss2, ref2, rtol=1e-5, atol=1e-5), (loss2, ref2)

    # General two-log torch-parity path (f32 gt), same tiling.
    loss3 = permutation_loss(pred2, gt2, src_ns2, tgt_ns2, batch_tile=16,
                             assume_binary_gt=False)
    jax.block_until_ready(loss3)
    assert jnp.allclose(loss3, ref2, rtol=1e-5, atol=1e-5), (loss3, ref2)

    print("KERNEL_OK")
</pallas_src>

<mosaic_0001>
module attributes {stable_mosaic.version = 11 : i64} {
  func.func @kernel(%arg0: i32, %arg1: memref<1xi32, #tpu.memory_space<smem>>, %arg2: memref<2x256xf32, #tpu.memory_space<vmem>>, %arg3: memref<2x256xbf16, #tpu.memory_space<vmem>>, %arg4: memref<2x1xi32, #tpu.memory_space<vmem>>, %arg5: memref<2x1xi32, #tpu.memory_space<vmem>>, %arg6: memref<1x256xi32, #tpu.memory_space<vmem>>, %arg7: memref<1x256xi32, #tpu.memory_space<vmem>>, %arg8: memref<1x1xf32, #tpu.memory_space<vmem>>, %arg9: memref<2x256xf32, #tpu.memory_space<vmem>>) attributes {dimension_semantics = [#tpu.dimension_semantics<arbitrary>], iteration_bounds = array<i64: 1>, scalar_prefetch = 1 : i64, scratch_operands = 1 : i64, tpu.core_type = #tpu.core_type<tc>, window_params = [{transform_indices = @transform_0, window_bounds = array<i64: 2, 256>}, {transform_indices = @transform_1, window_bounds = array<i64: 2, 256>}, {transform_indices = @transform_2, window_bounds = array<i64: 2, 1>}, {transform_indices = @transform_3, window_bounds = array<i64: 2, 1>}, {pipeline_mode = #tpu.pipeline_mode<synchronous>, transform_indices = @transform_4, window_bounds = array<i64: 1, 256>}, {pipeline_mode = #tpu.pipeline_mode<synchronous>, transform_indices = @transform_5, window_bounds = array<i64: 1, 256>}, {pipeline_mode = #tpu.pipeline_mode<synchronous>, transform_indices = @transform_6, window_bounds = array<i64: 1, 1>}]} {
    %c0_i32 = arith.constant 0 : i32
    %0 = arith.cmpi eq, %arg0, %c0_i32 : i32
    %1 = arith.extui %0 : i1 to i32
    %c0_i32_0 = arith.constant 0 : i32
    %2 = arith.cmpi ne, %1, %c0_i32_0 : i32
    scf.if %2 {
      %cst_21 = arith.constant 0.000000e+00 : f32
      %33 = vector.broadcast %cst_21 : f32 to vector<2x256xf32>
      %c0_22 = arith.constant 0 : index
      %c0_23 = arith.constant 0 : index
      %34 = vector.load %arg9[%c0_22, %c0_23] : memref<2x256xf32, #tpu.memory_space<vmem>>, vector<2x256xf32>
      tpu.vector_store %arg9[%c0_22, %c0_23], %33 {strides = array<i32>} : memref<2x256xf32, #tpu.memory_space<vmem>>, vector<2x256xf32>,
    } else {
    }
    %c0 = arith.constant 0 : index
    %c0_1 = arith.constant 0 : index
    %3 = vector.load %arg2[%c0, %c0_1] : memref<2x256xf32, #tpu.memory_space<vmem>>, vector<2x256xf32>
    %c0_2 = arith.constant 0 : index
    %c0_3 = arith.constant 0 : index
    %4 = vector.load %arg3[%c0_2, %c0_3] : memref<2x256xbf16, #tpu.memory_space<vmem>>, vector<2x256xbf16>
    %5 = arith.extf %4 : vector<2x256xbf16> to vector<2x256xf32>
    %c0_4 = arith.constant 0 : index
    %c0_5 = arith.constant 0 : index
    %6 = vector.load %arg6[%c0_4, %c0_5] : memref<1x256xi32, #tpu.memory_space<vmem>>, vector<1x256xi32>
    %c0_6 = arith.constant 0 : index
    %c0_7 = arith.constant 0 : index
    %7 = vector.load %arg4[%c0_6, %c0_7] : memref<2x1xi32, #tpu.memory_space<vmem>>, vector<2x1xi32>
    %8 = vector.broadcast %6 : vector<1x256xi32> to vector<2x256xi32>
    %9 = vector.broadcast %7 : vector<2x1xi32> to vector<2x256xi32>
    %10 = arith.cmpi slt, %8, %9 : vector<2x256xi32>
    %c0_8 = arith.constant 0 : index
    %c0_9 = arith.constant 0 : index
    %11 = vector.load %arg7[%c0_8, %c0_9] : memref<1x256xi32, #tpu.memory_space<vmem>>, vector<1x256xi32>
    %c0_10 = arith.constant 0 : index
    %c0_11 = arith.constant 0 : index
    %12 = vector.load %arg5[%c0_10, %c0_11] : memref<2x1xi32, #tpu.memory_space<vmem>>, vector<2x1xi32>
    %13 = vector.broadcast %11 : vector<1x256xi32> to vector<2x256xi32>
    %14 = vector.broadcast %12 : vector<2x1xi32> to vector<2x256xi32>
    %15 = arith.cmpi slt, %13, %14 : vector<2x256xi32>
    %16 = arith.andi %10, %15 : vector<2x256xi1>
    %cst = arith.constant 5.000000e-01 : f32
    %17 = vector.broadcast %cst : f32 to vector<2x256xf32>
    %18 = arith.cmpf ogt, %5, %17 : vector<2x256xf32>
    %cst_12 = arith.constant 1.000000e+00 : f32
    %19 = vector.broadcast %cst_12 : f32 to vector<2x256xf32>
    %20 = arith.subf %19, %3 : vector<2x256xf32>
    %21 = arith.select %18, %3, %20 : vector<2x256xi1>, vector<2x256xf32>
    %22 = math.log %21 : vector<2x256xf32>
    %cst_13 = arith.constant -1.000000e+02 : f32
    %23 = vector.broadcast %cst_13 : f32 to vector<2x256xf32>
    %24 = arith.maximumf %22, %23 : vector<2x256xf32>
    %c0_14 = arith.constant 0 : index
    %c0_15 = arith.constant 0 : index
    %25 = vector.load %arg9[%c0_14, %c0_15] : memref<2x256xf32, #tpu.memory_space<vmem>>, vector<2x256xf32>
    %cst_16 = arith.constant 0.000000e+00 : f32
    %26 = vector.broadcast %cst_16 : f32 to vector<2x256xf32>
    %27 = arith.select %16, %24, %26 : vector<2x256xi1>, vector<2x256xf32>
    %28 = arith.addf %25, %27 : vector<2x256xf32>
    %c0_17 = arith.constant 0 : index
    %c0_18 = arith.constant 0 : index
    %29 = vector.load %arg9[%c0_17, %c0_18] : memref<2x256xf32, #tpu.memory_space<vmem>>, vector<2x256xf32>
    tpu.vector_store %arg9[%c0_17, %c0_18], %28 {strides = array<i32>} : memref<2x256xf32, #tpu.memory_space<vmem>>, vector<2x256xf32>,
    %c0_i32_19 = arith.constant 0 : i32
    %30 = arith.cmpi eq, %arg0, %c0_i32_19 : i32
    %31 = arith.extui %30 : i1 to i32
    %c0_i32_20 = arith.constant 0 : i32
    %32 = arith.cmpi ne, %31, %c0_i32_20 : i32
    scf.if %32 {
      %c0_21 = arith.constant 0 : index
      %33 = memref.load %arg1[%c0_21] : memref<1xi32, #tpu.memory_space<smem>>
      %34 = arith.sitofp %33 : i32 to f32
      %c0_22 = arith.constant 0 : index
      %c0_23 = arith.constant 0 : index
      %35 = vector.load %arg9[%c0_22, %c0_23] : memref<2x256xf32, #tpu.memory_space<vmem>>, vector<2x256xf32>
      %36 = vector.shape_cast %35 : vector<2x256xf32> to vector<1x2x256xf32>
      %cst_24 = arith.constant dense<0.000000e+00> : vector<1xf32>
      %37 = vector.multi_reduction <add>, %36, %cst_24 [1, 2] : vector<1x2x256xf32> to vector<1xf32>
      %38 = vector.shape_cast %37 : vector<1xf32> to vector<1x1x1xf32>
      %39 = vector.extract %38[0, 0, 0] : f32 from vector<1x1x1xf32>
      %cst_25 = arith.constant 0.000000e+00 : f32
      %40 = arith.subf %cst_25, %39 : f32
      %41 = arith.divf %40, %34 : f32
      %42 = vector.broadcast %41 : f32 to vector<1x1xf32>
      %c0_26 = arith.constant 0 : index
      %c0_27 = arith.constant 0 : index
      %43 = vector.load %arg8[%c0_26, %c0_27] : memref<1x1xf32, #tpu.memory_space<vmem>>, vector<1x1xf32>
      tpu.vector_store %arg8[%c0_26, %c0_27], %42 {strides = array<i32>} : memref<1x1xf32, #tpu.memory_space<vmem>>, vector<1x1xf32>,
    } else {
    }
    return
  }
  func.func @transform_0(%arg0: i32, %arg1: memref<1xi32, #tpu.memory_space<smem>>) -> (i32, i32) {
    %c0_i32 = arith.constant 0 : i32
    %c0_i32_0 = arith.constant 0 : i32
    return %arg0, %c0_i32 : i32, i32
  }
  func.func @transform_1(%arg0: i32, %arg1: memref<1xi32, #tpu.memory_space<smem>>) -> (i32, i32) {
    %c0_i32 = arith.constant 0 : i32
    %c0_i32_0 = arith.constant 0 : i32
    return %arg0, %c0_i32 : i32, i32
  }
  func.func @transform_2(%arg0: i32, %arg1: memref<1xi32, #tpu.memory_space<smem>>) -> (i32, i32) {
    %c0_i32 = arith.constant 0 : i32
    %c0_i32_0 = arith.constant 0 : i32
    return %arg0, %c0_i32 : i32, i32
  }
  func.func @transform_3(%arg0: i32, %arg1: memref<1xi32, #tpu.memory_space<smem>>) -> (i32, i32) {
    %c0_i32 = arith.constant 0 : i32
    %c0_i32_0 = arith.constant 0 : i32
    return %arg0, %c0_i32 : i32, i32
  }
  func.func @transform_4(%arg0: i32, %arg1: memref<1xi32, #tpu.memory_space<smem>>) -> (i32, i32) {
    %c0_i32 = arith.constant 0 : i32
    %c0_i32_0 = arith.constant 0 : i32
    %c0_i32_1 = arith.constant 0 : i32
    return %c0_i32, %c0_i32_0 : i32, i32
  }
  func.func @transform_5(%arg0: i32, %arg1: memref<1xi32, #tpu.memory_space<smem>>) -> (i32, i32) {
    %c0_i32 = arith.constant 0 : i32
    %c0_i32_0 = arith.constant 0 : i32
    %c0_i32_1 = arith.constant 0 : i32
    return %c0_i32, %c0_i32_0 : i32, i32
  }
  func.func @transform_6(%arg0: i32, %arg1: memref<1xi32, #tpu.memory_space<smem>>) -> (i32, i32) {
    %c0_i32 = arith.constant 0 : i32
    %c0_i32_0 = arith.constant 0 : i32
    %c0_i32_1 = arith.constant 0 : i32
    return %c0_i32, %c0_i32_0 : i32, i32
  }
}

</mosaic_0001>

<llo_original>
// kernel: tpu_custom_call.1
$region0: #{tpu_custom_call.1}
  #allocation0 [shape = 'u32[]', space=smem, size = 0x4, offset = 0x4, fixed_abs, tag = 'smem constant byte address 0x4 - core index']
  #allocation1 [shape = 'u32[144,128]{1,0:T(1,128)}', space=vmem, size = 0x12000, scoped, tag = 'internal scratch']
  #allocation2 [shape = 'f32[2,256]{1,0:T(2,128)}', space=vmem, size = 0x800, scoped, tag = 'scratch operand']
  #allocation3 [shape = 's32[1]{0}', space=sflag, size = 0x4, scoped, tag = 'scoped memory for tpu_custom_call.1']
  #allocation4 [shape = 's32[1]{0:T(128)S(6)}', space=smem, size = 0x200, scoped, tag = 'prefetched SMEM operand 0']
  %s0 = inlined_call_operand.<no memory space> [shape: s32[1], index: 0, kind: input, shape index: {}]
  %s1 = inlined_call_operand.vmem [shape: f32[2,256], index: 1, kind: input, shape index: {}]
  %s2 = inlined_call_operand.vmem [shape: bf16[2,256], index: 2, kind: input, shape index: {}]
  %s3 = inlined_call_operand.vmem [shape: s32[2,1], index: 3, kind: input, shape index: {}]
  %s4 = inlined_call_operand.vmem [shape: s32[2,1], index: 4, kind: input, shape index: {}]
  %s5 = inlined_call_operand.vmem [shape: s32[1,256], index: 5, kind: input, shape index: {}]
  %s6 = inlined_call_operand.vmem [shape: s32[1,256], index: 6, kind: input, shape index: {}]
  %s7 = inlined_call_operand.hbm [shape: f32[1,1], index: 7, kind: output, shape index: {}]
  %s8 = sld [smem:[#allocation0]]
  $region42: #{tpu_custom_call.1} parent=0
    _
  %s10 = ssub.s32 1, %s8
  %s11 = scalar_select 0, %s10, %s8
  %12 = sst [smem:[#allocation4]] %s0
  $region1: #{tpu_custom_call.1} parent=0
    #allocation5 [shape = 'u8[512]{0}', space=vmem, size = 0x400, scoped, tag = 'output window, operand 0, single buffered']
    #allocation6 [shape = 's32[1]{0}', space=sflag, size = 0x4, scoped, tag = 'scoped memory for tpu_custom_call.1']
    %13 = vsyncpa [#allocation6], 0
    // Predicated region
    $region2: #{tpu_custom_call.1} parent=1 // pred_check
      _
    $region3: #{tpu_custom_call.1} parent=1 // pred_check_branch
      %15 = sbr.rel (0) target = $region5
    $region4: #{tpu_custom_call.1} parent=1 // pred_region
      _
    $region5: #{tpu_custom_call.1} parent=1 // pred_fallthru
      _
    // Predicated region
    $region6: #{tpu_custom_call.1} parent=1 // pred_check
      _
    $region7: #{tpu_custom_call.1} parent=1 // pred_check_branch
      %17 = sbr.rel (0) target = $region9
    $region8: #{tpu_custom_call.1} parent=1 // pred_region
      _
    $region9: #{tpu_custom_call.1} parent=1 // pred_fallthru
      _
    // Predicated region
    $region10: #{tpu_custom_call.1} parent=1 // pred_check
      _
    $region11: #{tpu_custom_call.1} parent=1 // pred_check_branch
      %19 = sbr.rel (0) target = $region13
    $region12: #{tpu_custom_call.1} parent=1 // pred_region
      _
    $region13: #{tpu_custom_call.1} parent=1 // pred_fallthru
      _
    // Predicated region
    $region14: #{tpu_custom_call.1} parent=1 // pred_check
      _
    $region15: #{tpu_custom_call.1} parent=1 // pred_check_branch
      %21 = sbr.rel (0) target = $region17
    $region16: #{tpu_custom_call.1} parent=1 // pred_region
      _
    $region17: #{tpu_custom_call.1} parent=1 // pred_fallthru
      _
    // Predicated region
    $region18: #{tpu_custom_call.1} parent=1 // pred_check
      _
    $region19: #{tpu_custom_call.1} parent=1 // pred_check_branch
      %23 = sbr.rel (0) target = $region21
    $region20: #{tpu_custom_call.1} parent=1 // pred_region
      _
    $region21: #{tpu_custom_call.1} parent=1 // pred_fallthru
      _
    // Predicated region
    $region22: #{tpu_custom_call.1} parent=1 // pred_check
      _
    $region23: #{tpu_custom_call.1} parent=1 // pred_check_branch
      %25 = sbr.rel (0) target = $region25
    $region24: #{tpu_custom_call.1} parent=1 // pred_region
      _
    $region25: #{tpu_custom_call.1} parent=1 // pred_fallthru
      _
    %p26 = scmp.eq.s32.totalorder 0, 0
    // Predicated region
    $region26: #{tpu_custom_call.1} parent=1 // pred_check
      %p27 = pneg %p26
    $region27: #{tpu_custom_call.1} parent=1 // pred_check_branch
      %29 = sbr.rel (%p27) target = $region29
    $region28: #{tpu_custom_call.1} parent=1 // pred_region
      %30 = vst [vmem:[#allocation2] sm:$0xf] 0.0
    $region29: #{tpu_custom_call.1} parent=1 // pred_fallthru
      _
    %v31 = vld [vmem:[%s1] sm:$0xf]
    %v32 = vld [vmem:[%s2] sm:$0x3]
    %v33 = vunpack.c.l.bf16 %v32
    %v34 = vld [vmem:[%s5] sm:$0x3]
    %v35 = vld [vmem:[%s3] sm:$0x3]
    %v36 = vlaneseq
    %v37 = vshrl.u32 %v36, 7
    %v38 = vsub.s32 0, %v37
    %v39 = vrot.slane %v34, %v38
    %v40 = vlaneseq
    %v41 = vshrl.u32 %v40, 7
    %v42 = vsub.s32 1, %v41
    %v43 = vrot.slane %v34, %v42
    %44 = vset.pattern.permute.xlu0 0
    %45 = vperm.xlu0 %44, %v35
    %v46 = vpop.permute.xlu0 %45
    %vm47 = vcmp.lt.s32.totalorder %v39, %v46
    %vm48 = vcmp.lt.s32.totalorder %v43, %v46
    %v49 = vld [vmem:[%s6] sm:$0x3]
    %v50 = vld [vmem:[%s4] sm:$0x3]
    %v51 = vlaneseq
    %v52 = vshrl.u32 %v51, 7
    %v53 = vsub.s32 0, %v52
    %v54 = vrot.slane %v49, %v53
    %v55 = vlaneseq
    %v56 = vshrl.u32 %v55, 7
    %v57 = vsub.s32 1, %v56
    %v58 = vrot.slane %v49, %v57
    %59 = vset.pattern.permute.xlu0 0
    %60 = vperm.xlu0 %59, %v50
    %v61 = vpop.permute.xlu0 %60
    %vm62 = vcmp.lt.s32.totalorder %v54, %v61
    %vm63 = vcmp.lt.s32.totalorder %v58, %v61
    %vm64 = vmand %vm47, %vm62
    %vm65 = vmand %vm48, %vm63
    %vm66 = vcmp.gt.f32.partialorder %v33, 0.5
    %v67 = vsub.f32 1.0, %v31
    %v68 = vsel %vm66, %v31, %v67
    %v69 = vlog2.pop %v68
    %v70 = vmul.f32 %v69, 0.6931472
    %v71 = vmax.f32 %v70, -100.0
    %v72 = vld [vmem:[#allocation2] sm:$0xf]
    %v75 = vunpack.c.l.s4 1983009808
    %v76 = vunpack.c.0.s8 %v75
    %v77 = vlaneseq
    %v78 = vshrl.u32 %v77, 7
    %v79 = vsub.s32 %v76, %v78
    %v80 = vrot.slane %v71, %v79
    %v81 = vcombine.high %v80, %v80
    %v84 = vsel %vm64, %v80, 0.0
    %v85 = vsel %vm65, %v81, 0.0
    %v88 = vcombine.low %v84, %v85
    %v90 = vunpack.c.l.s4 1983009808
    %v91 = vunpack.c.0.s8 %v90
    %v92 = vlaneseq
    %v93 = vshrl.u32 %v92, 7
    %v94 = vsub.s32 %v91, %v93
    %v95 = vrot.slane %v88, %v94
    %v97 = vadd.f32 %v72, %v95
    %98 = vst [vmem:[#allocation2] sm:$0xf] %v97
    // Predicated region
    $region30: #{tpu_custom_call.1} parent=1 // pred_check
      %p99 = pneg %p26
    $region31: #{tpu_custom_call.1} parent=1 // pred_check_branch
      %101 = sbr.rel (%p99) target = $region33
    $region32: #{tpu_custom_call.1} parent=1 // pred_region
      %s102 = sld [smem:[#allocation4]]
      %s103 = scvt.s32.f32 %s102
      %v104 = vld [vmem:[#allocation2] sm:$0xf]
      %v107 = vunpack.c.l.s4 1983009808
      %v108 = vunpack.c.0.s8 %v107
      %v109 = vlaneseq
      %v110 = vshrl.u32 %v109, 7
      %v111 = vsub.s32 %v108, %v110
      %v112 = vrot.slane %v104, %v111
      %v113 = vcombine.high %v112, %v112
      %vm116 = vcmask 1041408
      %v117 = vsel %vm116, %v112, 0.0
      %v118 = vsel %vm116, %v113, 0.0
      %v119 = vadd.f32 %v117, %v118
      %120 = vadd.xlane.f32.xlu0 %v119
      %v121 = vpop.xlane.xlu0 %120
      %v122 = vrot.slane %v121, 4
      %v123 = vadd.f32 %v121, %v122
      %v124 = vrot.slane %v123, 2
      %v125 = vadd.f32 %v123, %v124
      %v126 = vrot.slane %v125, 1
      %v127 = vadd.f32 %v125, %v126
      %s128 = vtos %v127
      %s129 = ssub.f32 0.0, %s128
      %v130 = vstv %s103
      %v131 = vrcp.pop %v130
      %s132 = vtos %v131
      %s133 = smul.f32 %s129, %s132
      %v134 = vstv %s133
      %vm135 = vcmask 0
      %136 = vst.msk [vmem:[#allocation5] sm:$0x1] %vm135, %v134
    $region33: #{tpu_custom_call.1} parent=1 // pred_fallthru
      _
    // Predicated region
    $region34: #{tpu_custom_call.1} parent=1 // pred_check
      _
    $region35: #{tpu_custom_call.1} parent=1 // pred_check_branch
      %138 = sbr.rel (0) target = $region37
    $region36: #{tpu_custom_call.1} parent=1 // pred_region
      %s140 = ssub.s32 16, 16
      %141 = vsyncadd [#allocation6], %s140
      %s143 = sshll.u32 [#allocation5], 4
      %s144 = int_to_ptr.vmem [resolvable:$true] %s143
      %146 = dma.vmem_to_hbm [thread:$0]  %s144, 16, %s7, [#allocation6]
    $region37: #{tpu_custom_call.1} parent=1 // pred_fallthru
      _
    // Predicated region
    $region38: #{tpu_custom_call.1} parent=1 // pred_check
      _
    $region39: #{tpu_custom_call.1} parent=1 // pred_check_branch
      %148 = sbr.rel (0) target = $region41
    $region40: #{tpu_custom_call.1} parent=1 // pred_region
      %149 = dma.done [#allocation6], 16
    $region41: #{tpu_custom_call.1} parent=1 // pred_fallthru
      _
    %150 = vsyncpa [#allocation6], 1

</llo_original>
